<compile_context>
chip_gen: v7x
topology: tpu7x:2x2x1
jax: 0.10.0
libtpu: 0.0.40
codegen_flags: <defaults>
</compile_context>

<pallas_src>
import math

import jax
import jax.numpy as jnp
from jax.experimental import pallas as pl
from jax.experimental.pallas import tpu as pltpu

_MAX_BLOCK_ROWS = 512      # multiple of 8 (sublanes)
_MAX_BLOCK_LANES = 2048    # multiple of 128 (lanes)
# (512, 2048) blocks: f32 x (4 MiB) + int8 mask (1 MiB) + f32 out (4 MiB),
# double-buffered = ~18 MiB.  32 MiB scoped VMEM covers it on all chips.
_VMEM_LIMIT_BYTES = 32 * 1024 * 1024


def _choose_layout(size):
    """Pick a 2D layout (rows, lanes, pad) for `size` elements.

    Preference order:
      1. No pad, lane-dense (lanes % 128 == 0), rows % 8 == 0, widest lanes.
      2. No pad, lane-dense, widest lanes.
      3. No pad, ragged lanes: widest divisor of `size` in
         [128, _MAX_BLOCK_LANES], preferring rows % 8 == 0 (full-extent lane
         block still fits VMEM since lanes <= _MAX_BLOCK_LANES).
      4. Pathological sizes (e.g. primes): pad flat array to a multiple of
         128 -- the only case that still pays a per-call pad/slice.
    """
    lane_opts = [l for l in (2048, 1024, 512, 256, 128) if size % l == 0]
    if lane_opts:
        good = [l for l in lane_opts if (size // l) % 8 == 0]
        lanes = max(good) if good else max(lane_opts)
        return size // lanes, lanes, 0

    divisors = set()
    d = 1
    while d * d <= size:
        if size % d == 0:
            divisors.add(d)
            divisors.add(size // d)
        d += 1
    cand = [c for c in divisors if 128 <= c <= _MAX_BLOCK_LANES]
    if cand:
        good = [c for c in cand if (size // c) % 8 == 0]
        lanes = max(good) if good else max(cand)
        return size // lanes, lanes, 0

    lanes = 128
    rows = -(-size // lanes)
    return rows, lanes, rows * lanes - size


def _block_dims(rows, lanes):
    # Block dims must be multiples of (8, 128) or equal to the full extent.
    if lanes % 128 == 0:
        bl = min(lanes, _MAX_BLOCK_LANES)
    else:
        bl = lanes                      # ragged: full extent (<= _MAX_BLOCK_LANES)
    if rows <= _MAX_BLOCK_ROWS:
        br = rows                       # full extent
    else:
        br = _MAX_BLOCK_ROWS            # 512, a multiple of 8
    return br, bl


def _mask_mul_kernel(x_ref, m_ref, o_ref):
    # Elementwise hot path on the VPU; the int8 -> x.dtype widening is free
    # filler (kernel is HBM-DMA bound).
    o_ref[...] = x_ref[...] * m_ref[...].astype(x_ref.dtype)


def _masked_multiply_2d(x2, m2):
    """out2 = x2 * m2 for 2D arrays (mask in int8), tiled + pipelined."""
    rows, lanes = x2.shape
    br, bl = _block_dims(rows, lanes)
    grid = (pl.cdiv(rows, br), pl.cdiv(lanes, bl))
    size = rows * lanes
    bytes_accessed = int(
        size * x2.dtype.itemsize          # read x
        + size * m2.dtype.itemsize        # read mask (int8)
        + size * x2.dtype.itemsize        # write out
    )
    # TODO(synk): on v7x, an explicit CORE_PARALLEL split of the row axis (or
    # pl.core_map over the 2-TC mesh) could use both TensorCores' DMA paths.
    return pl.pallas_call(
        _mask_mul_kernel,
        out_shape=jax.ShapeDtypeStruct((rows, lanes), x2.dtype),
        grid=grid,
        in_specs=[
            pl.BlockSpec((br, bl), lambda i, j: (i, j)),
            pl.BlockSpec((br, bl), lambda i, j: (i, j)),
        ],
        out_specs=pl.BlockSpec((br, bl), lambda i, j: (i, j)),
        compiler_params=pltpu.CompilerParams(
            dimension_semantics=("parallel", "parallel"),
            vmem_limit_bytes=_VMEM_LIMIT_BYTES,
        ),
        cost_estimate=pl.CostEstimate(
            flops=size, transcendentals=0, bytes_accessed=bytes_accessed),
    )(x2, m2)


def mask_layer_forward(x, mask):
    """Standalone `x * mask` via the Pallas kernel.

    Note: this path converts the mask to int8 per call; the MaskLayer class
    below is the fast path (mask cached in int8 / kernel layout at init).
    """
    assert x.shape == mask.shape, "mask must match x shape"
    orig_shape = x.shape
    size = x.size
    rows, lanes, pad = _choose_layout(size)

    xf = x.reshape(-1)
    mf = mask.reshape(-1).astype(jnp.int8)   # 0/1 is exact in int8
    if pad:  # pathological sizes only
        xf = jnp.pad(xf, (0, pad))
        mf = jnp.pad(mf, (0, pad))

    out2 = _masked_multiply_2d(xf.reshape(rows, lanes), mf.reshape(rows, lanes))
    out = out2.reshape(-1)
    if pad:
        out = out[:size]
    return out.reshape(orig_shape)


class MaskLayer:
    """JAX/Pallas equivalent of the PyTorch MaskLayer.

    The mask is a fixed Bernoulli(1 - probability) sample drawn at init
    (deterministic given the PRNG key), mirroring
    torch.Tensor(output_shape).bernoulli_(1 - probability).
    """

    def __init__(self, output_shape, probability, key):
        self.output_shape = tuple(output_shape)
        self.probability = probability
        self._set_mask(probability, key)

    def _set_mask(self, probability, key):
        mask = jax.random.bernoulli(
            key, p=1.0 - probability, shape=self.output_shape
        )
        # Full-shape fp32 view kept only for inspection / reference checks.
        self.mask = mask.astype(jnp.float32)

        # Precompute the int8 mask in the kernel layout ONCE so no per-call
        # astype / pad / reshape traffic is paid for the mask.
        size = math.prod(self.output_shape)
        rows, lanes, pad = _choose_layout(size)
        mf = mask.reshape(-1).astype(jnp.int8)
        if pad:  # pathological sizes only
            mf = jnp.pad(mf, (0, pad))
        self._mask2d = mf.reshape(rows, lanes)
        self._layout = (rows, lanes, pad, size)

    def __call__(self, x):
        assert tuple(x.shape) == self.output_shape, "x must match output_shape"
        rows, lanes, pad, size = self._layout
        xf = x.reshape(-1)
        if pad:  # pathological sizes only; typical shapes pay no pad/slice
            xf = jnp.pad(xf, (0, pad))
        out2 = _masked_multiply_2d(xf.reshape(rows, lanes), self._mask2d)
        out = out2.reshape(-1)
        if pad:
            out = out[:size]
        return out.reshape(self.output_shape)

    def update_mask(self, new_probability, key):
        self.probability = new_probability
        self._set_mask(new_probability, key)

    def __str__(self):
        return (f"MaskLayer(output_shape={self.output_shape}, "
                f"probability={self.probability})")


if __name__ == "__main__":
    key = jax.random.PRNGKey(0)
    k_x, k_mask, k_x2, k_mask2, k_x3, k_mask3 = jax.random.split(key, 6)

    # Case 1: NCHW input, 128-divisible element count -> lane-dense (8, 256).
    N, C, H, W = 2, 4, 16, 16
    x = jax.random.normal(k_x, (N, C, H, W), dtype=jnp.float32)
    layer = MaskLayer(output_shape=(N, C, H, W), probability=0.3, key=k_mask)
    out = jax.block_until_ready(layer(x))
    ref = x * layer.mask
    assert out.shape == x.shape
    assert jnp.allclose(out, ref), "Pallas output mismatch vs reference (case 1)"

    # Case 2: ragged element count (2*3*14*14 = 1176) -> no-pad (8, 147)
    # layout; exercises full-extent (non-128) lane blocks with no per-call
    # pad/slice copies.
    shape2 = (2, 3, 14, 14)
    x2 = jax.random.normal(k_x2, shape2, dtype=jnp.float32)
    layer2 = MaskLayer(output_shape=shape2, probability=0.5, key=k_mask2)
    out2 = jax.block_until_ready(layer2(x2))
    ref2 = x2 * layer2.mask
    assert out2.shape == x2.shape
    assert jnp.allclose(out2, ref2), "Pallas output mismatch vs reference (case 2)"

    # Case 3: larger tensor -> (1024, 2048) slab, (512, 2048) blocks,
    # grid (2, 1): exercises the multi-step pipelined path.
    shape3 = (2, 4, 512, 512)
    x3 = jax.random.normal(k_x3, shape3, dtype=jnp.float32)
    layer3 = MaskLayer(output_shape=shape3, probability=0.25, key=k_mask3)
    out3 = jax.block_until_ready(layer3(x3))
    ref3 = x3 * layer3.mask
    assert out3.shape == x3.shape
    assert jnp.allclose(out3, ref3), "Pallas output mismatch vs reference (case 3)"

    print("KERNEL_OK")
</pallas_src>

<mosaic_0001>
module attributes {stable_mosaic.version = 11 : i64} {
  func.func @_mask_mul_kernel(%arg0: i32, %arg1: i32, %arg2: memref<8x256xf32, #tpu.memory_space<vmem>>, %arg3: memref<8x256xi8, #tpu.memory_space<vmem>>, %arg4: memref<8x256xf32, #tpu.memory_space<vmem>>) attributes {dimension_semantics = [#tpu.dimension_semantics<parallel>, #tpu.dimension_semantics<parallel>], iteration_bounds = array<i64: 1, 1>, scalar_prefetch = 0 : i64, scratch_operands = 0 : i64, tpu.core_type = #tpu.core_type<tc>, window_params = [{transform_indices = @transform_0, window_bounds = array<i64: 8, 256>}, {transform_indices = @transform_1, window_bounds = array<i64: 8, 256>}, {transform_indices = @transform_2, window_bounds = array<i64: 8, 256>}]} {
    %c0 = arith.constant 0 : index
    %c0_0 = arith.constant 0 : index
    %0 = vector.load %arg2[%c0, %c0_0] : memref<8x256xf32, #tpu.memory_space<vmem>>, vector<8x256xf32>
    %c0_1 = arith.constant 0 : index
    %c0_2 = arith.constant 0 : index
    %1 = vector.load %arg3[%c0_1, %c0_2] : memref<8x256xi8, #tpu.memory_space<vmem>>, vector<8x256xi8>
    %2 = arith.sitofp %1 : vector<8x256xi8> to vector<8x256xf32>
    %3 = arith.mulf %0, %2 : vector<8x256xf32>
    %c0_3 = arith.constant 0 : index
    %c0_4 = arith.constant 0 : index
    %4 = vector.load %arg4[%c0_3, %c0_4] : memref<8x256xf32, #tpu.memory_space<vmem>>, vector<8x256xf32>
    tpu.vector_store %arg4[%c0_3, %c0_4], %3 {strides = array<i32>} : memref<8x256xf32, #tpu.memory_space<vmem>>, vector<8x256xf32>,
    return
  }
  func.func @transform_0(%arg0: i32, %arg1: i32) -> (i32, i32) {
    %c0_i32 = arith.constant 0 : i32
    return %arg0, %arg1 : i32, i32
  }
  func.func @transform_1(%arg0: i32, %arg1: i32) -> (i32, i32) {
    %c0_i32 = arith.constant 0 : i32
    return %arg0, %arg1 : i32, i32
  }
  func.func @transform_2(%arg0: i32, %arg1: i32) -> (i32, i32) {
    %c0_i32 = arith.constant 0 : i32
    return %arg0, %arg1 : i32, i32
  }
}

</mosaic_0001>

<llo_original>
// kernel: tpu_custom_call.1
$region0: #{tpu_custom_call.1}
  #allocation0 [shape = 'u32[]', space=smem, size = 0x4, offset = 0x4, fixed_abs, tag = 'smem constant byte address 0x4 - core index']
  #allocation1 [shape = 'u32[144,128]{1,0:T(1,128)}', space=vmem, size = 0x12000, scoped, tag = 'internal scratch']
  %s0 = inlined_call_operand.hbm [shape: f32[8,256], index: 0, kind: input, shape index: {}]
  %s1 = inlined_call_operand.hbm [shape: s8[8,256], index: 1, kind: input, shape index: {}]
  %s2 = inlined_call_operand.hbm [shape: f32[8,256], index: 2, kind: output, shape index: {}]
  %s3 = sld [smem:[#allocation0]]
  $region26: #{tpu_custom_call.1} parent=0
    _
  %s5 = ssub.s32 1, %s3
  %s6 = scalar_select 0, %s5, %s3
  $region1: #{tpu_custom_call.1} parent=0
    #allocation2 [shape = 'u8[8192]{0}', space=vmem, size = 0x2000, scoped, tag = 'input window, operand 0, single buffered']
    #allocation3 [shape = 's32[1]{0}', space=sflag, size = 0x4, scoped, tag = 'scoped memory for tpu_custom_call.1']
    #allocation4 [shape = 's32[1]{0}', space=sflag, size = 0x4, scoped, tag = 'scoped memory for tpu_custom_call.1']
    #allocation5 [shape = 'u8[2048]{0}', space=vmem, size = 0x800, scoped, tag = 'input window, operand 1, single buffered']
    #allocation6 [shape = 's32[1]{0}', space=sflag, size = 0x4, scoped, tag = 'scoped memory for tpu_custom_call.1']
    #allocation7 [shape = 'u8[8192]{0}', space=vmem, size = 0x2000, scoped, tag = 'output window, operand 0, single buffered']
    %7 = vsyncpa [#allocation3], 0
    %8 = vsyncpa [#allocation6], 0
    %9 = vsyncpa [#allocation4], 0
    // Predicated region
    $region2: #{tpu_custom_call.1} parent=1 // pred_check
      _
    $region3: #{tpu_custom_call.1} parent=1 // pred_check_branch
      %11 = sbr.rel (0) target = $region5
    $region4: #{tpu_custom_call.1} parent=1 // pred_region
      %s13 = ssub.s32 256, 256
      %14 = vsyncadd [#allocation3], %s13
      %s16 = sshll.u32 [#allocation2], 4
      %s17 = int_to_ptr.vmem [resolvable:$true] %s16
      %19 = dma.hbm_to_vmem [thread:$0]  %s0, 256, %s17, [#allocation3]
    $region5: #{tpu_custom_call.1} parent=1 // pred_fallthru
      _
    // Predicated region
    $region6: #{tpu_custom_call.1} parent=1 // pred_check
      _
    $region7: #{tpu_custom_call.1} parent=1 // pred_check_branch
      %21 = sbr.rel (0) target = $region9
    $region8: #{tpu_custom_call.1} parent=1 // pred_region
      %s23 = ssub.s32 64, 64
      %24 = vsyncadd [#allocation6], %s23
      %s26 = sshll.u32 [#allocation5], 4
      %s27 = int_to_ptr.vmem [resolvable:$true] %s26
      %29 = dma.hbm_to_vmem [thread:$0]  %s1, 64, %s27, [#allocation6]
    $region9: #{tpu_custom_call.1} parent=1 // pred_fallthru
      _
    // Predicated region
    $region10: #{tpu_custom_call.1} parent=1 // pred_check
      _
    $region11: #{tpu_custom_call.1} parent=1 // pred_check_branch
      %31 = sbr.rel (0) target = $region13
    $region12: #{tpu_custom_call.1} parent=1 // pred_region
      %32 = dma.done [#allocation3], 256
    $region13: #{tpu_custom_call.1} parent=1 // pred_fallthru
      _
    // Predicated region
    $region14: #{tpu_custom_call.1} parent=1 // pred_check
      _
    $region15: #{tpu_custom_call.1} parent=1 // pred_check_branch
      %34 = sbr.rel (0) target = $region17
    $region16: #{tpu_custom_call.1} parent=1 // pred_region
      %35 = dma.done [#allocation6], 64
    $region17: #{tpu_custom_call.1} parent=1 // pred_fallthru
      _
    %v36 = vld [vmem:[#allocation2] sm:$0xff]
    %v37 = vld [vmem:[#allocation2 + $0x8] sm:$0xff]
    %v38 = vld [vmem:[#allocation5] sm:$0xf]
    %v39 = vunpack.c.0.s8 %v38
    %v40 = vunpack.c.1.s8 %v38
    %v41 = vcvt.s32.f32 %v39
    %v42 = vcvt.s32.f32 %v40
    %v43 = vmul.f32 %v36, %v41
    %v44 = vmul.f32 %v37, %v42
    %45 = vst [vmem:[#allocation7] sm:$0xff] %v43
    %46 = vst [vmem:[#allocation7 + $0x8] sm:$0xff] %v44
    // Predicated region
    $region18: #{tpu_custom_call.1} parent=1 // pred_check
      _
    $region19: #{tpu_custom_call.1} parent=1 // pred_check_branch
      %48 = sbr.rel (0) target = $region21
    $region20: #{tpu_custom_call.1} parent=1 // pred_region
      %s50 = ssub.s32 256, 256
      %51 = vsyncadd [#allocation4], %s50
      %s53 = sshll.u32 [#allocation7], 4
      %s54 = int_to_ptr.vmem [resolvable:$true] %s53
      %56 = dma.vmem_to_hbm [thread:$0]  %s54, 256, %s2, [#allocation4]
    $region21: #{tpu_custom_call.1} parent=1 // pred_fallthru
      _
    // Predicated region
    $region22: #{tpu_custom_call.1} parent=1 // pred_check
      _
    $region23: #{tpu_custom_call.1} parent=1 // pred_check_branch
      %58 = sbr.rel (0) target = $region25
    $region24: #{tpu_custom_call.1} parent=1 // pred_region
      %59 = dma.done [#allocation4], 256
    $region25: #{tpu_custom_call.1} parent=1 // pred_fallthru
      _
    %60 = vsyncpa [#allocation3], 1
    %61 = vsyncpa [#allocation6], 1
    %62 = vsyncpa [#allocation4], 1

</llo_original>
